<compile_context>
chip_gen: v7x
topology: tpu7x:2x2x1
jax: 0.10.0
libtpu: 0.0.40
codegen_flags: <defaults>
</compile_context>

<pallas_src>
import math

import jax
import jax.numpy as jnp
from jax.experimental import pallas as pl
from jax.experimental.pallas import tpu as pltpu


def _frozen_bn_kernel(s_ref, b_ref, x_ref, o_ref):
    # s_ref / b_ref: (rb, 1) per-row scale / shift (f32, VMEM-resident)
    # x_ref / o_ref: (rb, H*W) lane-dense slabs
    x = x_ref[...].astype(jnp.float32)
    o_ref[...] = (x * s_ref[...] + b_ref[...]).astype(o_ref.dtype)


def _pick_row_block(nc, c, hw, elem_bytes, target_bytes=4 << 20):
    """Return (rb, resident): rows per block and whether scale/shift can stay
    VMEM-resident (requires rb % C == 0)."""
    max_rows = max(1, target_bytes // max(1, hw * elem_bytes))
    if nc <= max_rows:
        # Whole row extent fits one block (nc is always a multiple of C).
        # Try to split into two legal blocks so megacore sharding has work.
        half = nc // 2
        if nc >= 2 * c and half % c == 0 and half % 8 == 0:
            return half, True
        return nc, True
    base = (c * 8) // math.gcd(c, 8)          # lcm(C, 8): sublane + channel aligned
    rb = (max_rows // base) * base
    if rb >= base:
        return rb, True
    # Channel stride too large for the target block: fall back to streaming
    # per-step (rb, 1) scale/shift slices (cheap, since rb is small here).
    return max(8, (max_rows // 8) * 8), False


def _frozen_bn_apply(x, scale, shift):
    """x: (N, C, H, W); scale/shift: folded per-channel f32 (C,)."""
    N, C, H, W = x.shape
    NC, HW = N * C, H * W
    elem_bytes = jnp.dtype(x.dtype).itemsize
    rb, resident = _pick_row_block(NC, C, HW, elem_bytes)

    # Free reshape for contiguous NCHW: rows = (n, c), lanes = flattened spatial.
    # TODO(synk): when H*W is not a multiple of 128 the last lane-vreg is
    # partially masked; a lane-chunked 2-D grid would avoid that for odd shapes.
    x2 = x.reshape(NC, HW)

    if resident:
        # rb % C == 0 -> every row block sees the same channel pattern, so one
        # (rb, 1) tile with a constant index_map is DMA'd once for the grid.
        reps = rb // C
        s_col = jnp.tile(scale, reps).reshape(rb, 1)
        b_col = jnp.tile(shift, reps).reshape(rb, 1)
        col_spec = pl.BlockSpec((rb, 1), lambda i: (0, 0))
    else:
        s_col = jnp.tile(scale, N).reshape(NC, 1)
        b_col = jnp.tile(shift, N).reshape(NC, 1)
        col_spec = pl.BlockSpec((rb, 1), lambda i: (i, 0))

    grid = (pl.cdiv(NC, rb),)

    # VMEM budget: in/out x-slabs double-buffered + lane-padded columns,
    # clamped to [32 MiB, 48 MiB] (safe headroom on v7x's 64 MiB physical,
    # well above v5e's 16 MiB scoped default).
    hw_pad = ((HW + 127) // 128) * 128
    x_buf = rb * hw_pad * elem_bytes
    col_buf = rb * 128 * 4
    vmem_limit = int(min(max(4 * x_buf + 4 * col_buf + (8 << 20), 32 << 20),
                         48 << 20))

    out2 = pl.pallas_call(
        _frozen_bn_kernel,
        out_shape=jax.ShapeDtypeStruct((NC, HW), x.dtype),
        grid=grid,
        in_specs=[
            col_spec,                                   # scale column (resident)
            col_spec,                                   # shift column (resident)
            pl.BlockSpec((rb, HW), lambda i: (i, 0)),   # lane-dense input slab
        ],
        out_specs=pl.BlockSpec((rb, HW), lambda i: (i, 0)),
        compiler_params=pltpu.CompilerParams(
            dimension_semantics=("parallel",),
            vmem_limit_bytes=vmem_limit,
        ),
    )(s_col, b_col, x2)
    return out2.reshape(N, C, H, W)


def make_frozen_batch_norm_2d(weight, bias, running_mean, running_var, eps=1e-5):
    """Fold the frozen statistics ONCE (module-init time) and return a jitted
    forward; per call only the pallas_call is launched."""
    scale = weight.astype(jnp.float32) * jax.lax.rsqrt(
        running_var.astype(jnp.float32) + jnp.float32(eps))
    shift = bias.astype(jnp.float32) - running_mean.astype(jnp.float32) * scale
    return jax.jit(lambda x: _frozen_bn_apply(x, scale, shift))


def frozen_batch_norm_2d(x, weight, bias, running_mean, running_var, eps=1e-5):
    """One-shot convenience wrapper (folds stats every call)."""
    scale = weight.astype(jnp.float32) * jax.lax.rsqrt(
        running_var.astype(jnp.float32) + jnp.float32(eps))
    shift = bias.astype(jnp.float32) - running_mean.astype(jnp.float32) * scale
    return _frozen_bn_apply(x, scale, shift)


def _reference(x, weight, bias, running_mean, running_var, eps=1e-5):
    w = weight.reshape(1, -1, 1, 1)
    b = bias.reshape(1, -1, 1, 1)
    rv = running_var.reshape(1, -1, 1, 1)
    rm = running_mean.reshape(1, -1, 1, 1)
    scale = w * jax.lax.rsqrt(rv + eps)
    shift = b - rm * scale
    return x * scale + shift


if __name__ == "__main__":
    key = jax.random.PRNGKey(0)
    kx, kw, kb, km, kv = jax.random.split(key, 5)

    N, C, H, W = 2, 4, 16, 16
    x = jax.random.normal(kx, (N, C, H, W), dtype=jnp.float32)
    # Frozen (non-trivial) statistics / affine params, PyTorch buffer shapes (C,).
    weight = 1.0 + 0.1 * jax.random.normal(kw, (C,), dtype=jnp.float32)
    bias = 0.1 * jax.random.normal(kb, (C,), dtype=jnp.float32)
    running_mean = 0.1 * jax.random.normal(km, (C,), dtype=jnp.float32)
    running_var = jax.random.uniform(kv, (C,), dtype=jnp.float32,
                                     minval=0.5, maxval=1.5)

    fbn = make_frozen_batch_norm_2d(weight, bias, running_mean, running_var)
    out = jax.block_until_ready(fbn(x))

    ref = _reference(x, weight, bias, running_mean, running_var)
    assert out.shape == (N, C, H, W), out.shape
    assert jnp.allclose(out, ref, atol=1e-5, rtol=1e-5), \
        float(jnp.max(jnp.abs(out - ref)))

    print("KERNEL_OK")
</pallas_src>

<mosaic_0001>
module attributes {stable_mosaic.version = 11 : i64} {
  func.func @_frozen_bn_kernel(%arg0: i32, %arg1: memref<8x1xf32, #tpu.memory_space<vmem>>, %arg2: memref<8x1xf32, #tpu.memory_space<vmem>>, %arg3: memref<8x256xf32, #tpu.memory_space<vmem>>, %arg4: memref<8x256xf32, #tpu.memory_space<vmem>>) attributes {dimension_semantics = [#tpu.dimension_semantics<parallel>], iteration_bounds = array<i64: 1>, scalar_prefetch = 0 : i64, scratch_operands = 0 : i64, tpu.core_type = #tpu.core_type<tc>, window_params = [{pipeline_mode = #tpu.pipeline_mode<synchronous>, transform_indices = @transform_0, window_bounds = array<i64: 8, 1>}, {pipeline_mode = #tpu.pipeline_mode<synchronous>, transform_indices = @transform_1, window_bounds = array<i64: 8, 1>}, {transform_indices = @transform_2, window_bounds = array<i64: 8, 256>}, {transform_indices = @transform_3, window_bounds = array<i64: 8, 256>}]} {
    %c0 = arith.constant 0 : index
    %c0_0 = arith.constant 0 : index
    %0 = vector.load %arg3[%c0, %c0_0] : memref<8x256xf32, #tpu.memory_space<vmem>>, vector<8x256xf32>
    %c0_1 = arith.constant 0 : index
    %c0_2 = arith.constant 0 : index
    %1 = vector.load %arg1[%c0_1, %c0_2] : memref<8x1xf32, #tpu.memory_space<vmem>>, vector<8x1xf32>
    %2 = vector.broadcast %1 : vector<8x1xf32> to vector<8x256xf32>
    %3 = arith.mulf %0, %2 : vector<8x256xf32>
    %c0_3 = arith.constant 0 : index
    %c0_4 = arith.constant 0 : index
    %4 = vector.load %arg2[%c0_3, %c0_4] : memref<8x1xf32, #tpu.memory_space<vmem>>, vector<8x1xf32>
    %5 = vector.broadcast %4 : vector<8x1xf32> to vector<8x256xf32>
    %6 = arith.addf %3, %5 : vector<8x256xf32>
    %c0_5 = arith.constant 0 : index
    %c0_6 = arith.constant 0 : index
    %7 = vector.load %arg4[%c0_5, %c0_6] : memref<8x256xf32, #tpu.memory_space<vmem>>, vector<8x256xf32>
    tpu.vector_store %arg4[%c0_5, %c0_6], %6 {strides = array<i32>} : memref<8x256xf32, #tpu.memory_space<vmem>>, vector<8x256xf32>,
    return
  }
  func.func @transform_0(%arg0: i32) -> (i32, i32) {
    %c0_i32 = arith.constant 0 : i32
    %c0_i32_0 = arith.constant 0 : i32
    %c0_i32_1 = arith.constant 0 : i32
    return %c0_i32, %c0_i32_0 : i32, i32
  }
  func.func @transform_1(%arg0: i32) -> (i32, i32) {
    %c0_i32 = arith.constant 0 : i32
    %c0_i32_0 = arith.constant 0 : i32
    %c0_i32_1 = arith.constant 0 : i32
    return %c0_i32, %c0_i32_0 : i32, i32
  }
  func.func @transform_2(%arg0: i32) -> (i32, i32) {
    %c0_i32 = arith.constant 0 : i32
    %c0_i32_0 = arith.constant 0 : i32
    return %arg0, %c0_i32 : i32, i32
  }
  func.func @transform_3(%arg0: i32) -> (i32, i32) {
    %c0_i32 = arith.constant 0 : i32
    %c0_i32_0 = arith.constant 0 : i32
    return %arg0, %c0_i32 : i32, i32
  }
}

</mosaic_0001>

<llo_original>
// kernel: tile.1
$region0: #{tile.1}
  %s0 = inlined_call_operand.vmem [shape: f32[2,4], index: 0, kind: input, shape index: {}]
  %s1 = inlined_call_operand.vmem [shape: f32[8,1], index: 1, kind: output, shape index: {}]
  $region1: #{tile.1} parent=0
    #allocation0 [shape = 'u8[4096]{0}', space=vmem, size = 0x1000, scoped, tag = 'scoped mem for input reshape']
    %s3 = sshllo.u32 0, 2
    %v4 = vld [vmem:[%s0] sm:%s3]
    %5 = vst [vmem:[#allocation0] sm:%s3] %v4
    %v6 = vld [vmem:[#allocation0] sm:$0x3]
    %vm7 = vcmask 7168
    %8 = vst.msk [vmem:[%s1] ss:$4 sm:$0x3] %vm7, %v6
    %v9 = vld [vmem:[#allocation0] sm:$0x3]
    %10 = vrot.lane.b32.xlu0 %v9, 127
    %v11 = vpop.permute.xlu0 %10
    %vm12 = vcmask 7168
    %s13 = scalar_lea.vmem %s1, 1
    %14 = vst.msk [vmem:[%s13] ss:$4 sm:$0x3] %vm12, %v11
    %v15 = vld [vmem:[#allocation0] sm:$0x3]
    %16 = vrot.lane.b32.xlu0 %v15, 126
    %v17 = vpop.permute.xlu0 %16
    %vm18 = vcmask 7168
    %s19 = scalar_lea.vmem %s1, 2
    %20 = vst.msk [vmem:[%s19] ss:$4 sm:$0x3] %vm18, %v17
    %v21 = vld [vmem:[#allocation0] sm:$0x3]
    %22 = vrot.lane.b32.xlu0 %v21, 125
    %v23 = vpop.permute.xlu0 %22
    %vm24 = vcmask 7168
    %s25 = scalar_lea.vmem %s1, 3
    %26 = vst.msk [vmem:[%s25] ss:$4 sm:$0x3] %vm24, %v23

// kernel: tile.14
$region0: #{tile.14}
  #allocation0 [shape = 's32[1]{0}', space=sflag, size = 0x4, scoped, tag = 'scoped memory for tile.14']
  %s0 = inlined_call_operand.vmem [shape: f32[4], index: 0, kind: input, shape index: {}]
  %s1 = inlined_call_operand.vmem [shape: f32[2,4], index: 1, kind: output, shape index: {}]
  // Predicated region
  $region2: #{tile.14} parent=0 // pred_check
    _
  $region3: #{tile.14} parent=0 // pred_check_branch
    %3 = sbr.rel (0) target = $region5
  $region4: #{tile.14} parent=0 // pred_region
    _
  $region5: #{tile.14} parent=0 // pred_fallthru
    _
  %v4 = vld [vmem:[%s0] ss:$0 sm:$0xff]
  %5 = vst [vmem:[%s1] sm:$0x3] %v4

// kernel: _lambda_.1
$region0: #{_lambda_.1}
  #allocation0 [shape = 'u32[]', space=smem, size = 0x4, offset = 0x4, fixed_abs, tag = 'smem constant byte address 0x4 - core index']
  #allocation1 [shape = 'u32[144,128]{1,0:T(1,128)}', space=vmem, size = 0x12000, scoped, tag = 'internal scratch']
  %s0 = inlined_call_operand.vmem [shape: f32[8,1], index: 0, kind: input, shape index: {}]
  %s1 = inlined_call_operand.vmem [shape: f32[8,1], index: 1, kind: input, shape index: {}]
  %s2 = inlined_call_operand.vmem [shape: f32[8,256], index: 2, kind: input, shape index: {}]
  %s3 = inlined_call_operand.vmem [shape: f32[8,256], index: 3, kind: output, shape index: {}]
  %s4 = sld [smem:[#allocation0]]
  $region22: #{_lambda_.1} parent=0
    _
  %s6 = ssub.s32 1, %s4
  %s7 = scalar_select 0, %s6, %s4
  // Predicated region
  $region2: #{_lambda_.1} parent=0 // pred_check
    _
  $region3: #{_lambda_.1} parent=0 // pred_check_branch
    %9 = sbr.rel (0) target = $region5
  $region4: #{_lambda_.1} parent=0 // pred_region
    _
  $region5: #{_lambda_.1} parent=0 // pred_fallthru
    _
  // Predicated region
  $region6: #{_lambda_.1} parent=0 // pred_check
    _
  $region7: #{_lambda_.1} parent=0 // pred_check_branch
    %11 = sbr.rel (0) target = $region9
  $region8: #{_lambda_.1} parent=0 // pred_region
    _
  $region9: #{_lambda_.1} parent=0 // pred_fallthru
    _
  // Predicated region
  $region10: #{_lambda_.1} parent=0 // pred_check
    _
  $region11: #{_lambda_.1} parent=0 // pred_check_branch
    %13 = sbr.rel (0) target = $region13
  $region12: #{_lambda_.1} parent=0 // pred_region
    _
  $region13: #{_lambda_.1} parent=0 // pred_fallthru
    _
  %v14 = vld [vmem:[%s2] sm:$0xff]
  %v15 = vld [vmem:[%s2 + $0x8] sm:$0xff]
  %v16 = vld [vmem:[%s0] sm:$0xff]
  %18 = vset.pattern.permute.xlu0 0
  %19 = vperm.xlu0 %18, %v16
  %v20 = vpop.permute.xlu0 %19
  %v22 = vmul.f32 %v14, %v20
  %v23 = vmul.f32 %v15, %v20
  %v24 = vld [vmem:[%s1] sm:$0xff]
  %26 = vset.pattern.permute.xlu0 0
  %27 = vperm.xlu0 %26, %v24
  %v28 = vpop.permute.xlu0 %27
  %v30 = vadd.f32 %v22, %v28
  %v31 = vadd.f32 %v23, %v28
  %32 = vst [vmem:[%s3] sm:$0xff] %v30
  %33 = vst [vmem:[%s3 + $0x8] sm:$0xff] %v31
  // Predicated region
  $region14: #{_lambda_.1} parent=0 // pred_check
    _
  $region15: #{_lambda_.1} parent=0 // pred_check_branch
    %35 = sbr.rel (0) target = $region17
  $region16: #{_lambda_.1} parent=0 // pred_region
    _
  $region17: #{_lambda_.1} parent=0 // pred_fallthru
    _
  // Predicated region
  $region18: #{_lambda_.1} parent=0 // pred_check
    _
  $region19: #{_lambda_.1} parent=0 // pred_check_branch
    %37 = sbr.rel (0) target = $region21
  $region20: #{_lambda_.1} parent=0 // pred_region
    _
  $region21: #{_lambda_.1} parent=0 // pred_fallthru
    _

</llo_original>
